<compile_context>
chip_gen: v7x
topology: tpu7x:2x2x1
jax: 0.10.0
libtpu: 0.0.40
codegen_flags: <defaults>
</compile_context>

<pallas_src>
import functools

import jax
import jax.numpy as jnp
from jax.experimental import pallas as pl
from jax.experimental.pallas import tpu as pltpu


def _silu(v):
    # x * sigmoid(x), written explicitly so kernel and reference match formula
    # for formula (exp stays in f32).
    return v * (1.0 / (1.0 + jnp.exp(-v)))


def _shift_time(a, shift, lane):
    """Shift a (C, T) tile along the last (time / lane) axis with zero fill.

    shift > 0: result[:, t] = a[:, t - shift]   (zeros for t <  shift)
    shift < 0: result[:, t] = a[:, t + |shift|] (zeros for t >= T - |shift|)
    Uses pltpu.roll (jnp.roll semantics, runs on the XLU) + a lane-iota mask,
    so the shift never leaves VMEM.
    """
    t_len = a.shape[-1]
    if shift > 0:
        rolled = pltpu.roll(a, shift, axis=a.ndim - 1)
        return jnp.where(lane >= shift, rolled, 0.0)
    else:
        s = -shift
        rolled = pltpu.roll(a, t_len - s, axis=a.ndim - 1)
        return jnp.where(lane < t_len - s, rolled, 0.0)


def _res_conv1d_kernel(x_ref, w1_ref, b1_ref, w2_ref, b2_ref, o_ref, *, dilation):
    x = x_ref[0].astype(jnp.float32)              # (C_in, T), channel-major
    a = _silu(x)                                  # norm1 = Identity, activation1

    # Shared lane index for both shift masks (hoisted once, reused twice).
    lane = jax.lax.broadcasted_iota(jnp.int32, a.shape, dimension=a.ndim - 1)

    # Dilated 3-tap conv as a single K = 3*C_in matmul.
    left = _shift_time(a, dilation, lane)         # a[:, t - d]  (tap k = 0)
    right = _shift_time(a, -dilation, lane)       # a[:, t + d]  (tap k = 2)
    x3 = jnp.concatenate([left, a, right], axis=0)            # (3*C_in, T)
    h = jnp.dot(w1_ref[...].astype(jnp.float32), x3,
                preferred_element_type=jnp.float32) + b1_ref[...]

    h = _silu(h)                                  # norm2 = Identity, activation2

    # 1x1 conv: (C_in, C_state) @ (C_state, T), bias, residual -- all fused.
    y = jnp.dot(w2_ref[...].astype(jnp.float32), h,
                preferred_element_type=jnp.float32) + b2_ref[...]
    o_ref[0] = (y + x).astype(o_ref.dtype)


def res_conv1d_block(x, w1, b1, w2, b2, *, dilation=1):
    """x: (B, C_in, T); w1: (C_state, C_in, 3); b1: (C_state,);
    w2: (C_in, C_state, 1); b2: (C_in,) -> (B, C_in, T)."""
    B, C_in, T = x.shape
    C_state = w1.shape[0]
    assert w1.shape == (C_state, C_in, 3)
    assert w2.shape == (C_in, C_state, 1)
    assert b1.shape == (C_state,) and b2.shape == (C_in,)
    assert 0 < dilation < T, "dilation must be in (0, T)"

    # Pack conv1 weight (O, I, K) -> (O, K*I) so taps k = 0, 1, 2 line up with
    # the [t-d, t, t+d] sublane stacking done in the kernel (one MXU matmul).
    w1_packed = jnp.transpose(w1, (0, 2, 1)).reshape(C_state, 3 * C_in)
    w2_packed = w2[:, :, 0]                       # (C_in, C_state)
    b1_col = b1.reshape(C_state, 1)
    b2_col = b2.reshape(C_in, 1)

    kernel = functools.partial(_res_conv1d_kernel, dilation=dilation)

    flops = 2 * B * T * (C_state * 3 * C_in + C_in * C_state)
    bytes_accessed = (2 * B * C_in * T + C_state * 3 * C_in + C_in * C_state
                      + C_state + C_in) * x.dtype.itemsize
    transcendentals = B * T * (C_in + C_state)    # one exp per silu element

    return pl.pallas_call(
        kernel,
        out_shape=jax.ShapeDtypeStruct((B, C_in, T), x.dtype),
        grid=(B,),
        in_specs=[
            pl.BlockSpec((1, C_in, T), lambda b: (b, 0, 0)),          # x
            pl.BlockSpec((C_state, 3 * C_in), lambda b: (0, 0)),      # packed W1
            pl.BlockSpec((C_state, 1), lambda b: (0, 0)),             # b1
            pl.BlockSpec((C_in, C_state), lambda b: (0, 0)),          # W2
            pl.BlockSpec((C_in, 1), lambda b: (0, 0)),                # b2
        ],
        out_specs=pl.BlockSpec((1, C_in, T), lambda b: (b, 0, 0)),
        compiler_params=pltpu.CompilerParams(dimension_semantics=("parallel",)),
        cost_estimate=pl.CostEstimate(flops=flops,
                                      transcendentals=transcendentals,
                                      bytes_accessed=bytes_accessed),
    )(x, w1_packed, b1_col, w2_packed, b2_col)


def reference_forward(x, w1, b1, w2, b2, *, dilation=1):
    """Pure-JAX ground truth replicating torch Conv1d semantics."""
    a = _silu(x)
    h = jax.lax.conv_general_dilated(
        a, w1, window_strides=(1,), padding=[(dilation, dilation)],
        rhs_dilation=(dilation,), dimension_numbers=("NCH", "OIH", "NCH"))
    h = h + b1[None, :, None]
    h = _silu(h)
    y = jax.lax.conv_general_dilated(
        h, w2, window_strides=(1,), padding=[(0, 0)],
        dimension_numbers=("NCH", "OIH", "NCH"))
    y = y + b2[None, :, None]
    return y + x


if __name__ == "__main__":
    key = jax.random.PRNGKey(0)
    k_x, k_w1, k_b1, k_w2, k_b2 = jax.random.split(key, 5)

    B, C_IN, C_STATE, T = 2, 64, 128, 128     # n_in=64, n_state=128, seq=128
    DILATION = 1

    x = jax.random.normal(k_x, (B, C_IN, T), jnp.float32)
    s = 0.05
    w1 = jax.random.normal(k_w1, (C_STATE, C_IN, 3), jnp.float32) * s   # conv1.weight
    b1 = jax.random.normal(k_b1, (C_STATE,), jnp.float32) * s           # conv1.bias
    w2 = jax.random.normal(k_w2, (C_IN, C_STATE, 1), jnp.float32) * s   # conv2.weight
    b2 = jax.random.normal(k_b2, (C_IN,), jnp.float32) * s              # conv2.bias

    out = res_conv1d_block(x, w1, b1, w2, b2, dilation=DILATION)
    out = jax.block_until_ready(out)

    ref = jax.block_until_ready(reference_forward(x, w1, b1, w2, b2, dilation=DILATION))
    assert out.shape == (B, C_IN, T)
    assert jnp.allclose(out, ref, atol=1e-4, rtol=1e-4), (
        "mismatch vs reference, max abs err = %e"
        % float(jnp.max(jnp.abs(out - ref))))

    print("KERNEL_OK")
</pallas_src>

<mosaic_0001>
module attributes {stable_mosaic.version = 11 : i64} {
  func.func @_res_conv1d_kernel(%arg0: i32, %arg1: memref<1x64x128xf32, #tpu.memory_space<vmem>>, %arg2: memref<128x192xf32, #tpu.memory_space<vmem>>, %arg3: memref<128x1xf32, #tpu.memory_space<vmem>>, %arg4: memref<64x128xf32, #tpu.memory_space<vmem>>, %arg5: memref<64x1xf32, #tpu.memory_space<vmem>>, %arg6: memref<1x64x128xf32, #tpu.memory_space<vmem>>) attributes {dimension_semantics = [#tpu.dimension_semantics<parallel>], iteration_bounds = array<i64: 2>, scalar_prefetch = 0 : i64, scratch_operands = 0 : i64, tpu.core_type = #tpu.core_type<tc>, window_params = [{transform_indices = @transform_0, window_bounds = array<i64: 1, 64, 128>}, {pipeline_mode = #tpu.pipeline_mode<synchronous>, transform_indices = @transform_1, window_bounds = array<i64: 128, 192>}, {pipeline_mode = #tpu.pipeline_mode<synchronous>, transform_indices = @transform_2, window_bounds = array<i64: 128, 1>}, {pipeline_mode = #tpu.pipeline_mode<synchronous>, transform_indices = @transform_3, window_bounds = array<i64: 64, 128>}, {pipeline_mode = #tpu.pipeline_mode<synchronous>, transform_indices = @transform_4, window_bounds = array<i64: 64, 1>}, {transform_indices = @transform_5, window_bounds = array<i64: 1, 64, 128>}]} {
    %c0 = arith.constant 0 : index
    %c0_0 = arith.constant 0 : index
    %c0_1 = arith.constant 0 : index
    %0 = vector.load %arg1[%c0, %c0_0, %c0_1] : memref<1x64x128xf32, #tpu.memory_space<vmem>>, vector<1x64x128xf32>
    %1 = vector.shape_cast %0 : vector<1x64x128xf32> to vector<64x128xf32>
    %cst = arith.constant 0.000000e+00 : f32
    %2 = vector.broadcast %cst : f32 to vector<64x128xf32>
    %3 = arith.subf %2, %1 : vector<64x128xf32>
    %4 = math.exp %3 : vector<64x128xf32>
    %cst_2 = arith.constant 1.000000e+00 : f32
    %5 = vector.broadcast %cst_2 : f32 to vector<64x128xf32>
    %6 = arith.addf %5, %4 : vector<64x128xf32>
    %cst_3 = arith.constant 1.000000e+00 : f32
    %7 = vector.broadcast %cst_3 : f32 to vector<64x128xf32>
    %8 = arith.divf %7, %6 : vector<64x128xf32>
    %9 = arith.mulf %1, %8 : vector<64x128xf32>
    %10 = tpu.iota {dimensions = array<i32: 1>} : vector<64x128xi32>
    %c1_i32 = arith.constant 1 : i32
    %11 = tpu.dynamic_rotate %9 by %c1_i32 dim 1 : vector<64x128xf32>, i32 -> vector<64x128xf32>
    %c1_i32_4 = arith.constant 1 : i32
    %12 = vector.broadcast %c1_i32_4 : i32 to vector<64x128xi32>
    %13 = arith.cmpi sge, %10, %12 : vector<64x128xi32>
    %cst_5 = arith.constant 0.000000e+00 : f32
    %14 = vector.broadcast %cst_5 : f32 to vector<64x128xf32>
    %15 = arith.select %13, %11, %14 : vector<64x128xi1>, vector<64x128xf32>
    %c127_i32 = arith.constant 127 : i32
    %16 = tpu.dynamic_rotate %9 by %c127_i32 dim 1 : vector<64x128xf32>, i32 -> vector<64x128xf32>
    %c127_i32_6 = arith.constant 127 : i32
    %17 = vector.broadcast %c127_i32_6 : i32 to vector<64x128xi32>
    %18 = arith.cmpi slt, %10, %17 : vector<64x128xi32>
    %cst_7 = arith.constant 0.000000e+00 : f32
    %19 = vector.broadcast %cst_7 : f32 to vector<64x128xf32>
    %20 = arith.select %18, %16, %19 : vector<64x128xi1>, vector<64x128xf32>
    %21 = tpu.concatenate %15, %9, %20 in 0 : vector<64x128xf32>, vector<64x128xf32>, vector<64x128xf32> -> vector<192x128xf32>
    %c0_8 = arith.constant 0 : index
    %c0_9 = arith.constant 0 : index
    %22 = vector.load %arg2[%c0_8, %c0_9] : memref<128x192xf32, #tpu.memory_space<vmem>>, vector<128x192xf32>
    %cst_10 = arith.constant dense<0.000000e+00> : vector<128x128xf32>
    %23 = tpu.matmul %22, %21, %cst_10 {dimension_numbers = #tpu.dot_dimension_numbers<[1], [0], [0], [1], [0, 0, 1, 1], [], []>} : vector<128x192xf32>, vector<192x128xf32>, vector<128x128xf32> -> vector<128x128xf32>
    %c0_11 = arith.constant 0 : index
    %c0_12 = arith.constant 0 : index
    %24 = vector.load %arg3[%c0_11, %c0_12] : memref<128x1xf32, #tpu.memory_space<vmem>>, vector<128x1xf32>
    %25 = vector.broadcast %24 : vector<128x1xf32> to vector<128x128xf32>
    %26 = arith.addf %23, %25 : vector<128x128xf32>
    %cst_13 = arith.constant 0.000000e+00 : f32
    %27 = vector.broadcast %cst_13 : f32 to vector<128x128xf32>
    %28 = arith.subf %27, %26 : vector<128x128xf32>
    %29 = math.exp %28 : vector<128x128xf32>
    %cst_14 = arith.constant 1.000000e+00 : f32
    %30 = vector.broadcast %cst_14 : f32 to vector<128x128xf32>
    %31 = arith.addf %30, %29 : vector<128x128xf32>
    %cst_15 = arith.constant 1.000000e+00 : f32
    %32 = vector.broadcast %cst_15 : f32 to vector<128x128xf32>
    %33 = arith.divf %32, %31 : vector<128x128xf32>
    %34 = arith.mulf %26, %33 : vector<128x128xf32>
    %c0_16 = arith.constant 0 : index
    %c0_17 = arith.constant 0 : index
    %35 = vector.load %arg4[%c0_16, %c0_17] : memref<64x128xf32, #tpu.memory_space<vmem>>, vector<64x128xf32>
    %cst_18 = arith.constant dense<0.000000e+00> : vector<64x128xf32>
    %36 = tpu.matmul %35, %34, %cst_18 {dimension_numbers = #tpu.dot_dimension_numbers<[1], [0], [0], [1], [0, 0, 1, 1], [], []>} : vector<64x128xf32>, vector<128x128xf32>, vector<64x128xf32> -> vector<64x128xf32>
    %c0_19 = arith.constant 0 : index
    %c0_20 = arith.constant 0 : index
    %37 = vector.load %arg5[%c0_19, %c0_20] : memref<64x1xf32, #tpu.memory_space<vmem>>, vector<64x1xf32>
    %38 = vector.broadcast %37 : vector<64x1xf32> to vector<64x128xf32>
    %39 = arith.addf %36, %38 : vector<64x128xf32>
    %40 = arith.addf %39, %1 : vector<64x128xf32>
    %c0_21 = arith.constant 0 : index
    %c0_22 = arith.constant 0 : index
    %c0_23 = arith.constant 0 : index
    %41 = vector.load %arg6[%c0_21, %c0_22, %c0_23] : memref<1x64x128xf32, #tpu.memory_space<vmem>>, vector<1x64x128xf32>
    %42 = vector.shape_cast %41 : vector<1x64x128xf32> to vector<64x128xf32>
    %43 = vector.shape_cast %40 : vector<64x128xf32> to vector<1x64x128xf32>
    tpu.vector_store %arg6[%c0_21, %c0_22, %c0_23], %43 {strides = array<i32>} : memref<1x64x128xf32, #tpu.memory_space<vmem>>, vector<1x64x128xf32>,
    return
  }
  func.func @transform_0(%arg0: i32) -> (i32, i32, i32) {
    %c0_i32 = arith.constant 0 : i32
    %c0_i32_0 = arith.constant 0 : i32
    %c0_i32_1 = arith.constant 0 : i32
    return %arg0, %c0_i32, %c0_i32_0 : i32, i32, i32
  }
  func.func @transform_1(%arg0: i32) -> (i32, i32) {
    %c0_i32 = arith.constant 0 : i32
    %c0_i32_0 = arith.constant 0 : i32
    %c0_i32_1 = arith.constant 0 : i32
    return %c0_i32, %c0_i32_0 : i32, i32
  }
  func.func @transform_2(%arg0: i32) -> (i32, i32) {
    %c0_i32 = arith.constant 0 : i32
    %c0_i32_0 = arith.constant 0 : i32
    %c0_i32_1 = arith.constant 0 : i32
    return %c0_i32, %c0_i32_0 : i32, i32
  }
  func.func @transform_3(%arg0: i32) -> (i32, i32) {
    %c0_i32 = arith.constant 0 : i32
    %c0_i32_0 = arith.constant 0 : i32
    %c0_i32_1 = arith.constant 0 : i32
    return %c0_i32, %c0_i32_0 : i32, i32
  }
  func.func @transform_4(%arg0: i32) -> (i32, i32) {
    %c0_i32 = arith.constant 0 : i32
    %c0_i32_0 = arith.constant 0 : i32
    %c0_i32_1 = arith.constant 0 : i32
    return %c0_i32, %c0_i32_0 : i32, i32
  }
  func.func @transform_5(%arg0: i32) -> (i32, i32, i32) {
    %c0_i32 = arith.constant 0 : i32
    %c0_i32_0 = arith.constant 0 : i32
    %c0_i32_1 = arith.constant 0 : i32
    return %arg0, %c0_i32, %c0_i32_0 : i32, i32, i32
  }
}

</mosaic_0001>

<llo_original>
// kernel: tpu_custom_call.1
$region0: #{tpu_custom_call.1}
  #allocation0 [shape = 'u32[]', space=smem, size = 0x4, offset = 0x4, fixed_abs, tag = 'smem constant byte address 0x4 - core index']
  #allocation1 [shape = 'u32[144,128]{1,0:T(1,128)}', space=vmem, size = 0x12000, scoped, tag = 'internal scratch']
  %s0 = inlined_call_operand.vmem [shape: f32[2,64,128], index: 0, kind: input, shape index: {}]
  %s1 = inlined_call_operand.vmem [shape: f32[128,192], index: 1, kind: input, shape index: {}]
  %s2 = inlined_call_operand.vmem [shape: f32[128,1], index: 2, kind: input, shape index: {}]
  %s3 = inlined_call_operand.vmem [shape: f32[64,128], index: 3, kind: input, shape index: {}]
  %s4 = inlined_call_operand.vmem [shape: f32[64,1], index: 4, kind: input, shape index: {}]
  %s5 = inlined_call_operand.hbm [shape: f32[2,64,128], index: 5, kind: output, shape index: {}]
  %s6 = sld [smem:[#allocation0]]
  $region53: #{tpu_custom_call.1} parent=0
    _
  %s8 = ssub.s32 1, %s6
  %s9 = scalar_select 0, %s8, %s6
  $region1: #{tpu_custom_call.1} parent=0
    #allocation2 [shape = 'u8[65536]{0}', space=vmem, size = 0x10000, scoped, tag = 'output window, operand 0']
    #allocation3 [shape = 's32[2]{0}', space=sflag, size = 0x8, scoped, tag = 'scoped memory for tpu_custom_call.1']
    %10 = vsyncpa [#allocation3], 0
    %s11 = scalar_lea.sflag [#allocation3], 1
    %12 = vsyncpa %s11, 0
    loop: start=0, step=1, limit=4
    $region2: #{tpu_custom_call.1} parent=1 // loop_pre_header
      _
    $region3: #{tpu_custom_call.1} parent=1 // loop_header
      %s14 = sphi 0, %s18
      %p15 = scmp.ge.s32.totalorder %s14, 4
      %s24 = sphi 0, %s26
      %s27 = sphi 0, %s24
      %s28 = sphi 0, %s27
      %s44 = sphi 0, %s28
      %s48 = sphi 0, %s48
      %s50 = sphi 0, %s48
      %s51 = sphi 0, %s50
      %s65 = sphi 0, %s51
      %s69 = sphi 0, %s69
      %s71 = sphi 0, %s69
      %s72 = sphi 0, %s71
      %s86 = sphi 0, %s72
      %s90 = sphi 0, %s90
      %s92 = sphi 0, %s90
      %s93 = sphi 0, %s92
      %s107 = sphi 0, %s93
      %s111 = sphi 0, %s111
      %s113 = sphi 0, %s111
      %s114 = sphi 0, %s113
      %s128 = sphi 0, %s114
      %s134 = sphi 0, %s136
      %s137 = sphi 0, %s134
      %s138 = sphi 0, %s137
      %s154 = sphi 0, %s138
    $region4: #{tpu_custom_call.1} parent=1 // loop_header_branch
      %17 = sbr.rel (%p15) target = $region8
    $region5: #{tpu_custom_call.1} parent=1 // loop_body
      %s19 = ssub.s32 %s14, 1
      %s20 = ssub.s32 %s14, 2
      %s21 = sadd.s32 %s14, 1
      %s22 = ssub.s32 %s14, %s21
      %p23 = scmp.eq.s32.totalorder %s22, 0
      %s25 = sadd.s32 %s24, 1
      %s26 = scalar_select %p23, %s24, %s25
      %p29 = pneg %p23
      %p30 = scmp.eq.s32.totalorder %s14, 1
      %p31 = por %p29, %p30
      %p32 = scmp.ne.s32.totalorder %s24, %s27
      %p33 = scmp.eq.s32.totalorder %s14, 0
      %p34 = por %p32, %p33
      %p35 = scmp.ne.s32.totalorder %s24, %s27
      %p36 = scmp.eq.s32.totalorder %s19, 1
      %p37 = por %p35, %p36
      %p38 = scmp.ne.s32.totalorder %s27, %s28
      %p39 = scmp.eq.s32.totalorder %s19, 0
      %p40 = por %p38, %p39
      %p41 = scmp.ne.s32.totalorder %s27, %s28
      %p42 = scmp.eq.s32.totalorder %s20, 1
      %p43 = por %p41, %p42
      %p45 = scmp.ne.s32.totalorder %s28, %s44
      %p46 = scmp.eq.s32.totalorder %s20, 0
      %p47 = por %p45, %p46
      %s49 = sadd.s32 %s48, 1
      %p52 = scmp.eq.s32.totalorder %s14, 1
      %p53 = scmp.ne.s32.totalorder %s48, %s50
      %p54 = scmp.eq.s32.totalorder %s14, 0
      %p55 = por %p53, %p54
      %p56 = scmp.ne.s32.totalorder %s48, %s50
      %p57 = scmp.eq.s32.totalorder %s19, 1
      %p58 = por %p56, %p57
      %p59 = scmp.ne.s32.totalorder %s50, %s51
      %p60 = scmp.eq.s32.totalorder %s19, 0
      %p61 = por %p59, %p60
      %p62 = scmp.ne.s32.totalorder %s50, %s51
      %p63 = scmp.eq.s32.totalorder %s20, 1
      %p64 = por %p62, %p63
      %p66 = scmp.ne.s32.totalorder %s51, %s65
      %p67 = scmp.eq.s32.totalorder %s20, 0
      %p68 = por %p66, %p67
      %s70 = sadd.s32 %s69, 1
      %p73 = scmp.eq.s32.totalorder %s14, 1
      %p74 = scmp.ne.s32.totalorder %s69, %s71
      %p75 = scmp.eq.s32.totalorder %s14, 0
      %p76 = por %p74, %p75
      %p77 = scmp.ne.s32.totalorder %s69, %s71
      %p78 = scmp.eq.s32.totalorder %s19, 1
      %p79 = por %p77, %p78
      %p80 = scmp.ne.s32.totalorder %s71, %s72
      %p81 = scmp.eq.s32.totalorder %s19, 0
      %p82 = por %p80, %p81
      %p83 = scmp.ne.s32.totalorder %s71, %s72
      %p84 = scmp.eq.s32.totalorder %s20, 1
      %p85 = por %p83, %p84
      %p87 = scmp.ne.s32.totalorder %s72, %s86
      %p88 = scmp.eq.s32.totalorder %s20, 0
      %p89 = por %p87, %p88
      %s91 = sadd.s32 %s90, 1
      %p94 = scmp.eq.s32.totalorder %s14, 1
      %p95 = scmp.ne.s32.totalorder %s90, %s92
      %p96 = scmp.eq.s32.totalorder %s14, 0
      %p97 = por %p95, %p96
      %p98 = scmp.ne.s32.totalorder %s90, %s92
      %p99 = scmp.eq.s32.totalorder %s19, 1
      %p100 = por %p98, %p99
      %p101 = scmp.ne.s32.totalorder %s92, %s93
      %p102 = scmp.eq.s32.totalorder %s19, 0
      %p103 = por %p101, %p102
      %p104 = scmp.ne.s32.totalorder %s92, %s93
      %p105 = scmp.eq.s32.totalorder %s20, 1
      %p106 = por %p104, %p105
      %p108 = scmp.ne.s32.totalorder %s93, %s107
      %p109 = scmp.eq.s32.totalorder %s20, 0
      %p110 = por %p108, %p109
      %s112 = sadd.s32 %s111, 1
      %p115 = scmp.eq.s32.totalorder %s14, 1
      %p116 = scmp.ne.s32.totalorder %s111, %s113
      %p117 = scmp.eq.s32.totalorder %s14, 0
      %p118 = por %p116, %p117
      %p119 = scmp.ne.s32.totalorder %s111, %s113
      %p120 = scmp.eq.s32.totalorder %s19, 1
      %p121 = por %p119, %p120
      %p122 = scmp.ne.s32.totalorder %s113, %s114
      %p123 = scmp.eq.s32.totalorder %s19, 0
      %p124 = por %p122, %p123
      %p125 = scmp.ne.s32.totalorder %s113, %s114
      %p126 = scmp.eq.s32.totalorder %s20, 1
      %p127 = por %p125, %p126
      %p129 = scmp.ne.s32.totalorder %s114, %s128
      %p130 = scmp.eq.s32.totalorder %s20, 0
      %p131 = por %p129, %p130
      %s132 = ssub.s32 %s14, %s21
      %p133 = scmp.eq.s32.totalorder %s132, 0
      %s135 = sadd.s32 %s134, 1
      %s136 = scalar_select %p133, %s134, %s135
      %p139 = pneg %p133
      %p140 = scmp.eq.s32.totalorder %s14, 1
      %p141 = por %p139, %p140
      %p142 = scmp.ne.s32.totalorder %s134, %s137
      %p143 = scmp.eq.s32.totalorder %s14, 0
      %p144 = por %p142, %p143
      %p145 = scmp.ne.s32.totalorder %s134, %s137
      %p146 = scmp.eq.s32.totalorder %s19, 1
      %p147 = por %p145, %p146
      %p148 = scmp.ne.s32.totalorder %s137, %s138
      %p149 = scmp.eq.s32.totalorder %s19, 0
      %p150 = por %p148, %p149
      %p151 = scmp.ne.s32.totalorder %s137, %s138
      %p152 = scmp.eq.s32.totalorder %s20, 1
      %p153 = por %p151, %p152
      %p155 = scmp.ne.s32.totalorder %s138, %s154
      %p156 = scmp.eq.s32.totalorder %s20, 0
      %p157 = por %p155, %p156
      %p158 = scmp.le.s32.totalorder 1, %s14
      %p159 = scmp.lt.s32.totalorder %s14, 3
      %p160 = pnand %p158, %p159
      %p161 = pneg %p160
      // Predicated region
      $region9: #{tpu_custom_call.1} parent=5 // pred_check
        _
      $region10: #{tpu_custom_call.1} parent=5 // pred_check_branch
        %163 = sbr.rel (%p160) target = $region12
      $region11: #{tpu_custom_call.1} parent=5 // pred_region
        %s164 = ssub.s32 %s14, 1
        // Predicated region
        $region13: #{tpu_custom_call.1} parent=11 // pred_check
          %p165 = pneg %p61
        $region14: #{tpu_custom_call.1} parent=11 // pred_check_branch
          %167 = sbr.rel (%p165) target = $region16
        $region15: #{tpu_custom_call.1} parent=11 // pred_region
          _
        $region16: #{tpu_custom_call.1} parent=11 // pred_fallthru
          _
        // Predicated region
        $region17: #{tpu_custom_call.1} parent=11 // pred_check
          %p168 = pneg %p82
        $region18: #{tpu_custom_call.1} parent=11 // pred_check_branch
          %170 = sbr.rel (%p168) target = $region20
        $region19: #{tpu_custom_call.1} parent=11 // pred_region
          _
        $region20: #{tpu_custom_call.1} parent=11 // pred_fallthru
          _
        // Predicated region
        $region21: #{tpu_custom_call.1} parent=11 // pred_check
          %p171 = pneg %p103
        $region22: #{tpu_custom_call.1} parent=11 // pred_check_branch
          %173 = sbr.rel (%p171) target = $region24
        $region23: #{tpu_custom_call.1} parent=11 // pred_region
          _
        $region24: #{tpu_custom_call.1} parent=11 // pred_fallthru
          _
        // Predicated region
        $region25: #{tpu_custom_call.1} parent=11 // pred_check
          %p174 = pneg %p124
        $region26: #{tpu_custom_call.1} parent=11 // pred_check_branch
          %176 = sbr.rel (%p174) target = $region28
        $region27: #{tpu_custom_call.1} parent=11 // pred_region
          _
        $region28: #{tpu_custom_call.1} parent=11 // pred_fallthru
          _
      $region12: #{tpu_custom_call.1} parent=5 // pred_fallthru
        _
      %p177 = scmp.lt.s32.totalorder %s14, 2
      // Predicated region
      $region29: #{tpu_custom_call.1} parent=5 // pred_check
        %p178 = pneg %p177
      $region30: #{tpu_custom_call.1} parent=5 // pred_check_branch
        %180 = sbr.rel (%p178) target = $region32
      $region31: #{tpu_custom_call.1} parent=5 // pred_region
        // Predicated region
        $region33: #{tpu_custom_call.1} parent=31 // pred_check
          %p181 = pneg %p34
        $region34: #{tpu_custom_call.1} parent=31 // pred_check_branch
          %183 = sbr.rel (%p181) target = $region36
        $region35: #{tpu_custom_call.1} parent=31 // pred_region
          %p184 = scmp.lt.s32.totalorder %s14, 1
          %s185 = scalar_select %p184, %s14, 1
          %s186 = smul.addr %s185, 8
          %s187 = smul.addr %s186, 8
          %s188 = scalar_lea.vmem %s0, %s187
        $region36: #{tpu_custom_call.1} parent=31 // pred_fallthru
          _
      $region32: #{tpu_custom_call.1} parent=5 // pred_fallthru
        _
      %p189 = scmp.le.s32.totalorder 1, %s14
      %p190 = scmp.lt.s32.totalorder %s14, 3
      %p191 = pnand %p189, %p190
      %p192 = pneg %p191
      // Predicated region
      $region37: #{tpu_custom_call.1} parent=5 // pred_check
        _
      $region38: #{tpu_custom_call.1} parent=5 // pred_check_branch
        %194 = sbr.rel (%p191) target = $region40
      $region39: #{tpu_custom_call.1} parent=5 // pred_region
        %s195 = ssub.s32 %s14, 1
        %p196 = scmp.lt.s32.totalorder %s19, 1
        %s197 = scalar_select %p196, %s19, 1
        %s198 = smul.addr %s197, 8
        %s199 = smul.addr %s198, 8
        %s200 = scalar_lea.vmem %s0, %s199
        %p201 = pneg %p40
        %p202 = pneg %p37
        %p203 = pneg %p61
        %p204 = pneg %p58
        %p205 = pneg %p82
        %p206 = pneg %p79
        %p207 = pneg %p103
        %p208 = pneg %p100
        %p209 = pneg %p124
        %p210 = pneg %p121
        %p211 = pneg %p150
        %p212 = pneg %p147
        %s213 = sand.u32 %s137, 1
        %s214 = scalar_lea.sflag [#allocation3], %s213
        %s215 = sand.u32 %s137, 1
        %s216 = smul.addr %s215, 64
        %s217 = scalar_lea.vmem [#allocation2], %s216
        %p218 = scmp.lt.s32.totalorder %s19, 1
        %s219 = scalar_select %p218, %s19, 1
        %s220 = smul.addr %s219, 8
        %s221 = smul.addr %s220, 8
        %s222 = scalar_lea.vmem %s0, %s221
        %v223 = vld [vmem:[%s222] sm:$0xff]
        %v224 = vld [vmem:[%s222 + $0x8] sm:$0xff]
        %v225 = vld [vmem:[%s222 + $0x10] sm:$0xff]
        %v226 = vld [vmem:[%s222 + $0x18] sm:$0xff]
        %v227 = vld [vmem:[%s222 + $0x20] sm:$0xff]
        %v228 = vld [vmem:[%s222 + $0x28] sm:$0xff]
        %v229 = vld [vmem:[%s222 + $0x30] sm:$0xff]
        %v230 = vld [vmem:[%s222 + $0x38] sm:$0xff]
        %v231 = vsub.f32 0.0, %v223
        %v232 = vsub.f32 0.0, %v224
        %v233 = vsub.f32 0.0, %v225
        %v234 = vsub.f32 0.0, %v226
        %v235 = vsub.f32 0.0, %v227
        %v236 = vsub.f32 0.0, %v228
        %v237 = vsub.f32 0.0, %v229
        %v238 = vsub.f32 0.0, %v230
        %v239 = vmul.f32 %v231, 1.442695
        %v240 = vpow.pop %v239
        %v241 = vmul.f32 %v232, 1.442695
        %v242 = vpow.pop %v241
        %v243 = vmul.f32 %v233, 1.442695
        %v244 = vpow.pop %v243
        %v245 = vmul.f32 %v234, 1.442695
        %v246 = vpow.pop %v245
        %v247 = vmul.f32 %v235, 1.442695
        %v248 = vpow.pop %v247
        %v249 = vmul.f32 %v236, 1.442695
        %v250 = vpow.pop %v249
        %v251 = vmul.f32 %v237, 1.442695
        %v252 = vpow.pop %v251
        %v253 = vmul.f32 %v238, 1.442695
        %v254 = vpow.pop %v253
        %v255 = vadd.f32 %v240, 1.0
        %v256 = vadd.f32 %v242, 1.0
        %v257 = vadd.f32 %v244, 1.0
        %v258 = vadd.f32 %v246, 1.0
        %v259 = vadd.f32 %v248, 1.0
        %v260 = vadd.f32 %v250, 1.0
        %v261 = vadd.f32 %v252, 1.0
        %v262 = vadd.f32 %v254, 1.0
        %v263 = vrcp.pop %v255
        %v264 = vmul.f32 1.0, %v263
        %v265 = vrcp.pop %v256
        %v266 = vmul.f32 1.0, %v265
        %v267 = vrcp.pop %v257
        %v268 = vmul.f32 1.0, %v267
        %v269 = vrcp.pop %v258
        %v270 = vmul.f32 1.0, %v269
        %v271 = vrcp.pop %v259
        %v272 = vmul.f32 1.0, %v271
        %v273 = vrcp.pop %v260
        %v274 = vmul.f32 1.0, %v273
        %v275 = vrcp.pop %v261
        %v276 = vmul.f32 1.0, %v275
        %v277 = vrcp.pop %v262
        %v278 = vmul.f32 1.0, %v277
        %v279 = vmul.f32 %v223, %v264
        %v280 = vmul.f32 %v224, %v266
        %v281 = vmul.f32 %v225, %v268
        %v282 = vmul.f32 %v226, %v270
        %v283 = vmul.f32 %v227, %v272
        %v284 = vmul.f32 %v228, %v274
        %v285 = vmul.f32 %v229, %v276
        %v286 = vmul.f32 %v230, %v278
        %v287 = vlaneseq
        %v288 = vand.u32 %v287, 127
        %289 = vrot.lane.b32.xlu0 %v279, 1
        %v290 = vpop.permute.xlu0 %289
        %291 = vrot.lane.b32.xlu0 %v280, 1
        %v292 = vpop.permute.xlu0 %291
        %293 = vrot.lane.b32.xlu0 %v281, 1
        %v294 = vpop.permute.xlu0 %293
        %295 = vrot.lane.b32.xlu0 %v282, 1
        %v296 = vpop.permute.xlu0 %295
        %297 = vrot.lane.b32.xlu0 %v283, 1
        %v298 = vpop.permute.xlu0 %297
        %299 = vrot.lane.b32.xlu0 %v284, 1
        %v300 = vpop.permute.xlu0 %299
        %301 = vrot.lane.b32.xlu0 %v285, 1
        %v302 = vpop.permute.xlu0 %301
        %303 = vrot.lane.b32.xlu0 %v286, 1
        %v304 = vpop.permute.xlu0 %303
        %vm305 = vcmp.ge.s32.totalorder %v288, 1
        %v306 = vsel %vm305, %v290, 0.0
        %v307 = vsel %vm305, %v292, 0.0
        %v308 = vsel %vm305, %v294, 0.0
        %v309 = vsel %vm305, %v296, 0.0
        %v310 = vsel %vm305, %v298, 0.0
        %v311 = vsel %vm305, %v300, 0.0
        %v312 = vsel %vm305, %v302, 0.0
        %v313 = vsel %vm305, %v304, 0.0
        %314 = vrot.lane.b32.xlu0 %v279, 127
        %v315 = vpop.permute.xlu0 %314
        %316 = vrot.lane.b32.xlu0 %v280, 127
        %v317 = vpop.permute.xlu0 %316
        %318 = vrot.lane.b32.xlu0 %v281, 127
        %v319 = vpop.permute.xlu0 %318
        %320 = vrot.lane.b32.xlu0 %v282, 127
        %v321 = vpop.permute.xlu0 %320
        %322 = vrot.lane.b32.xlu0 %v283, 127
        %v323 = vpop.permute.xlu0 %322
        %324 = vrot.lane.b32.xlu0 %v284, 127
        %v325 = vpop.permute.xlu0 %324
        %326 = vrot.lane.b32.xlu0 %v285, 127
        %v327 = vpop.permute.xlu0 %326
        %328 = vrot.lane.b32.xlu0 %v286, 127
        %v329 = vpop.permute.xlu0 %328
        %vm330 = vcmp.lt.s32.totalorder %v288, 127
        %v331 = vsel %vm330, %v315, 0.0
        %v332 = vsel %vm330, %v317, 0.0
        %v333 = vsel %vm330, %v319, 0.0
        %v334 = vsel %vm330, %v321, 0.0
        %v335 = vsel %vm330, %v323, 0.0
        %v336 = vsel %vm330, %v325, 0.0
        %v337 = vsel %vm330, %v327, 0.0
        %v338 = vsel %vm330, %v329, 0.0
        %v339 = vld [vmem:[%s1] sm:$0xff]
        %v340 = vld [vmem:[%s1 + $0x8] sm:$0xff]
        %v341 = vld [vmem:[%s1 + $0x10] sm:$0xff]
        %v342 = vld [vmem:[%s1 + $0x18] sm:$0xff]
        %v343 = vld [vmem:[%s1 + $0x20] sm:$0xff]
        %v344 = vld [vmem:[%s1 + $0x28] sm:$0xff]
        %v345 = vld [vmem:[%s1 + $0x30] sm:$0xff]
        %v346 = vld [vmem:[%s1 + $0x38] sm:$0xff]
        %v347 = vld [vmem:[%s1 + $0x40] sm:$0xff]
        %v348 = vld [vmem:[%s1 + $0x48] sm:$0xff]
        %v349 = vld [vmem:[%s1 + $0x50] sm:$0xff]
        %v350 = vld [vmem:[%s1 + $0x58] sm:$0xff]
        %v351 = vld [vmem:[%s1 + $0x60] sm:$0xff]
        %v352 = vld [vmem:[%s1 + $0x68] sm:$0xff]
        %v353 = vld [vmem:[%s1 + $0x70] sm:$0xff]
        %v354 = vld [vmem:[%s1 + $0x78] sm:$0xff]
        %v355 = vld [vmem:[%s1 + $0x80] sm:$0xff]
        %v356 = vld [vmem:[%s1 + $0x88] sm:$0xff]
        %v357 = vld [vmem:[%s1 + $0x90] sm:$0xff]
        %v358 = vld [vmem:[%s1 + $0x98] sm:$0xff]
        %v359 = vld [vmem:[%s1 + $0xa0] sm:$0xff]
        %v360 = vld [vmem:[%s1 + $0xa8] sm:$0xff]
        %v361 = vld [vmem:[%s1 + $0xb0] sm:$0xff]
        %v362 = vld [vmem:[%s1 + $0xb8] sm:$0xff]
        %v363 = vld [vmem:[%s1 + $0xc0] sm:$0xff]
        %v364 = vld [vmem:[%s1 + $0xc8] sm:$0xff]
        %v365 = vld [vmem:[%s1 + $0xd0] sm:$0xff]
        %v366 = vld [vmem:[%s1 + $0xd8] sm:$0xff]
        %v367 = vld [vmem:[%s1 + $0xe0] sm:$0xff]
        %v368 = vld [vmem:[%s1 + $0xe8] sm:$0xff]
        %v369 = vld [vmem:[%s1 + $0xf0] sm:$0xff]
        %v370 = vld [vmem:[%s1 + $0xf8] sm:$0xff]
        %v371 = vld [vmem:[%s2] sm:$0xff]
        %v372 = vld [vmem:[%s2 + $0x8] sm:$0xff]
        %v373 = vld [vmem:[%s2 + $0x10] sm:$0xff]
        %v374 = vld [vmem:[%s2 + $0x18] sm:$0xff]
        %v375 = vld [vmem:[%s2 + $0x20] sm:$0xff]
        %v376 = vld [vmem:[%s2 + $0x28] sm:$0xff]
        %v377 = vld [vmem:[%s2 + $0x30] sm:$0xff]
        %v378 = vld [vmem:[%s2 + $0x38] sm:$0xff]
        %v379 = vld [vmem:[%s2 + $0x40] sm:$0xff]
        %v380 = vld [vmem:[%s2 + $0x48] sm:$0xff]
        %v381 = vld [vmem:[%s2 + $0x50] sm:$0xff]
        %v382 = vld [vmem:[%s2 + $0x58] sm:$0xff]
        %v383 = vld [vmem:[%s2 + $0x60] sm:$0xff]
        %v384 = vld [vmem:[%s2 + $0x68] sm:$0xff]
        %v385 = vld [vmem:[%s2 + $0x70] sm:$0xff]
        %v386 = vld [vmem:[%s2 + $0x78] sm:$0xff]
        %388 = vset.pattern.permute.xlu0 0
        %389 = vperm.xlu0 %388, %v371
        %v390 = vpop.permute.xlu0 %389
        %393 = vset.pattern.permute.xlu0 0
        %394 = vperm.xlu0 %393, %v372
        %v395 = vpop.permute.xlu0 %394
        %398 = vset.pattern.permute.xlu0 0
        %399 = vperm.xlu0 %398, %v373
        %v400 = vpop.permute.xlu0 %399
        %403 = vset.pattern.permute.xlu0 0
        %404 = vperm.xlu0 %403, %v374
        %v405 = vpop.permute.xlu0 %404
        %408 = vset.pattern.permute.xlu0 0
        %409 = vperm.xlu0 %408, %v375
        %v410 = vpop.permute.xlu0 %409
        %413 = vset.pattern.permute.xlu0 0
        %414 = vperm.xlu0 %413, %v376
        %v415 = vpop.permute.xlu0 %414
        %418 = vset.pattern.permute.xlu0 0
        %419 = vperm.xlu0 %418, %v377
        %v420 = vpop.permute.xlu0 %419
        %423 = vset.pattern.permute.xlu0 0
        %424 = vperm.xlu0 %423, %v378
        %v425 = vpop.permute.xlu0 %424
        %428 = vset.pattern.permute.xlu0 0
        %429 = vperm.xlu0 %428, %v379
        %v430 = vpop.permute.xlu0 %429
        %433 = vset.pattern.permute.xlu0 0
        %434 = vperm.xlu0 %433, %v380
        %v435 = vpop.permute.xlu0 %434
        %438 = vset.pattern.permute.xlu0 0
        %439 = vperm.xlu0 %438, %v381
        %v440 = vpop.permute.xlu0 %439
        %443 = vset.pattern.permute.xlu0 0
        %444 = vperm.xlu0 %443, %v382
        %v445 = vpop.permute.xlu0 %444
        %448 = vset.pattern.permute.xlu0 0
        %449 = vperm.xlu0 %448, %v383
        %v450 = vpop.permute.xlu0 %449
        %453 = vset.pattern.permute.xlu0 0
        %454 = vperm.xlu0 %453, %v384
        %v455 = vpop.permute.xlu0 %454
        %458 = vset.pattern.permute.xlu0 0
        %459 = vperm.xlu0 %458, %v385
        %v460 = vpop.permute.xlu0 %459
        %463 = vset.pattern.permute.xlu0 0
        %464 = vperm.xlu0 %463, %v386
        %v465 = vpop.permute.xlu0 %464
        %vm467 = vcmask 523264
        %v469 = vsel %vm467, %v340, 0
        %v472 = vsel %vm467, %v342, 0
        %v475 = vsel %vm467, %v344, 0
        %v478 = vsel %vm467, %v346, 0
        %v481 = vsel %vm467, %v348, 0
        %v484 = vsel %vm467, %v350, 0
        %v487 = vsel %vm467, %v352, 0
        %v490 = vsel %vm467, %v354, 0
        %v493 = vsel %vm467, %v356, 0
        %v496 = vsel %vm467, %v358, 0
        %v499 = vsel %vm467, %v360, 0
        %v502 = vsel %vm467, %v362, 0
        %v505 = vsel %vm467, %v364, 0
        %v508 = vsel %vm467, %v366, 0
        %v511 = vsel %vm467, %v368, 0
        %v514 = vsel %vm467, %v370, 0
        %516 = vmatprep.subr.mxu0 0.0
        %517 = vmatpush1.msra.mxu0 %v306
        %518 = vmatprep.subr.mxu0 0.0
        %519 = vmatpush1.msra.mxu0 %v307
        %520 = vmatprep.subr.mxu0 0.0
        %521 = vmatpush1.msra.mxu0 %v308
        %522 = vmatprep.subr.mxu0 0.0
        %523 = vmatpush1.msra.mxu0 %v309
        %524 = vmatprep.subr.mxu0 0.0
        %525 = vmatpush1.msra.mxu0 %v310
        %526 = vmatprep.subr.mxu0 0.0
        %527 = vmatpush1.msra.mxu0 %v311
        %528 = vmatprep.subr.mxu0 0.0
        %529 = vmatpush1.msra.mxu0 %v312
        %530 = vmatprep.subr.mxu0 0.0
        %531 = vmatpush1.msra.mxu0 %v313
        %532 = vmatprep.subr.mxu0 0.0
        %533 = vmatpush1.msra.mxu0 %v279
        %534 = vmatprep.subr.mxu0 0.0
        %535 = vmatpush1.msra.mxu0 %v280
        %536 = vmatprep.subr.mxu0 0.0
        %537 = vmatpush1.msra.mxu0 %v281
        %538 = vmatprep.subr.mxu0 0.0
        %539 = vmatpush1.msra.mxu0 %v282
        %540 = vmatprep.subr.mxu0 0.0
        %541 = vmatpush1.msra.mxu0 %v283
        %542 = vmatprep.subr.mxu0 0.0
        %543 = vmatpush1.msra.mxu0 %v284
        %544 = vmatprep.subr.mxu0 0.0
        %545 = vmatpush1.msra.mxu0 %v285
        %546 = vmatprep.subr.mxu0 0.0
        %547 = vmatpush1.msra.mxu0 %v286
        %548 = vmatprep.subr.mxu0 0.0
        %549 = vmatpush1.msra.mxu0 %v331
        %550 = vmatprep.subr.mxu0 0.0
        %551 = vmatpush1.msra.mxu0 %v332
        %552 = vmatprep.subr.mxu0 0.0
        %553 = vmatpush1.msra.mxu0 %v333
        %554 = vmatprep.subr.mxu0 0.0
        %555 = vmatpush1.msra.mxu0 %v334
        %556 = vmatprep.subr.mxu0 0.0
        %557 = vmatpush1.msra.mxu0 %v335
        %558 = vmatprep.subr.mxu0 0.0
        %559 = vmatpush1.msra.mxu0 %v336
        %560 = vmatprep.subr.mxu0 0.0
        %561 = vmatpush1.msra.mxu0 %v337
        %562 = vmatprep.subr.mxu0 0.0
        %563 = vmatpush1.msra.mxu0 %v338
        %564 = vmatprep.subr.mxu0 0.0
        %565 = vmatpush1.msra.mxu0 0.0
        %566 = vmatprep.subr.mxu0 0.0
        %567 = vmatpush1.msra.mxu0 0.0
        %568 = vmatprep.subr.mxu0 0.0
        %569 = vmatpush1.msra.mxu0 0.0
        %570 = vmatprep.subr.mxu0 0.0
        %571 = vmatpush1.msra.mxu0 0.0
        %572 = vmatprep.subr.mxu0 0.0
        %573 = vmatpush1.msra.mxu0 0.0
        %574 = vmatprep.subr.mxu0 0.0
        %575 = vmatpush1.msra.mxu0 0.0
        %576 = vmatprep.subr.mxu0 0.0
        %577 = vmatpush1.msra.mxu0 0.0
        %578 = vmatprep.subr.mxu0 0.0
        %579 = vmatpush1.msra.mxu0 0.0
        %580 = vmatprep.mubr.f32.mxu0 %v469
        %581 = vmatmul.mubr.f32.gmra.mrb[0].mxu0 %v339
        %v582 = vpop.f32.mrb[0].mxu0
        %v583 = vadd.f32 %v390, %v582
        %v584 = vpop.f32.mrb[0].mxu0
        %585 = vmatprep.mubr.f32.mxu0 %v472
        %586 = vmatmul.mubr.f32.gmra.mrb[0].mxu0 %v341
        %v587 = vpop.f32.mrb[0].mxu0
        %v588 = vadd.f32 %v395, %v587
        %v589 = vpop.f32.mrb[0].mxu0
        %590 = vmatprep.mubr.f32.mxu0 %v475
        %591 = vmatmul.mubr.f32.gmra.mrb[0].mxu0 %v343
        %v592 = vpop.f32.mrb[0].mxu0
        %v593 = vadd.f32 %v400, %v592
        %v594 = vpop.f32.mrb[0].mxu0
        %595 = vmatprep.mubr.f32.mxu0 %v478
        %596 = vmatmul.mubr.f32.gmra.mrb[0].mxu0 %v345
        %v597 = vpop.f32.mrb[0].mxu0
        %v598 = vadd.f32 %v405, %v597
        %v599 = vpop.f32.mrb[0].mxu0
        %600 = vmatprep.mubr.f32.mxu0 %v481
        %601 = vmatmul.mubr.f32.gmra.mrb[0].mxu0 %v347
        %v602 = vpop.f32.mrb[0].mxu0
        %v603 = vadd.f32 %v410, %v602
        %v604 = vpop.f32.mrb[0].mxu0
        %605 = vmatprep.mubr.f32.mxu0 %v484
        %606 = vmatmul.mubr.f32.gmra.mrb[0].mxu0 %v349
        %v607 = vpop.f32.mrb[0].mxu0
        %v608 = vadd.f32 %v415, %v607
        %v609 = vpop.f32.mrb[0].mxu0
        %610 = vmatprep.mubr.f32.mxu0 %v487
        %611 = vmatmul.mubr.f32.gmra.mrb[0].mxu0 %v351
        %v612 = vpop.f32.mrb[0].mxu0
        %v613 = vadd.f32 %v420, %v612
        %v614 = vpop.f32.mrb[0].mxu0
        %615 = vmatprep.mubr.f32.mxu0 %v490
        %616 = vmatmul.mubr.f32.gmra.mrb[0].mxu0 %v353
        %v617 = vpop.f32.mrb[0].mxu0
        %v618 = vadd.f32 %v425, %v617
        %v619 = vpop.f32.mrb[0].mxu0
        %620 = vmatprep.mubr.f32.mxu0 %v493
        %621 = vmatmul.mubr.f32.gmra.mrb[0].mxu0 %v355
        %v622 = vpop.f32.mrb[0].mxu0
        %v623 = vadd.f32 %v430, %v622
        %v624 = vpop.f32.mrb[0].mxu0
        %625 = vmatprep.mubr.f32.mxu0 %v496
        %626 = vmatmul.mubr.f32.gmra.mrb[0].mxu0 %v357
        %v627 = vpop.f32.mrb[0].mxu0
        %v628 = vadd.f32 %v435, %v627
        %v629 = vpop.f32.mrb[0].mxu0
        %630 = vmatprep.mubr.f32.mxu0 %v499
        %631 = vmatmul.mubr.f32.gmra.mrb[0].mxu0 %v359
        %v632 = vpop.f32.mrb[0].mxu0
        %v633 = vadd.f32 %v440, %v632
        %v634 = vpop.f32.mrb[0].mxu0
        %635 = vmatprep.mubr.f32.mxu0 %v502
        %636 = vmatmul.mubr.f32.gmra.mrb[0].mxu0 %v361
        %v637 = vpop.f32.mrb[0].mxu0
        %v638 = vadd.f32 %v445, %v637
        %v639 = vpop.f32.mrb[0].mxu0
        %640 = vmatprep.mubr.f32.mxu0 %v505
        %641 = vmatmul.mubr.f32.gmra.mrb[0].mxu0 %v363
        %v642 = vpop.f32.mrb[0].mxu0
        %v643 = vadd.f32 %v450, %v642
        %v644 = vpop.f32.mrb[0].mxu0
        %645 = vmatprep.mubr.f32.mxu0 %v508
        %646 = vmatmul.mubr.f32.gmra.mrb[0].mxu0 %v365
        %v647 = vpop.f32.mrb[0].mxu0
        %v648 = vadd.f32 %v455, %v647
        %v649 = vpop.f32.mrb[0].mxu0
        %650 = vmatprep.mubr.f32.mxu0 %v511
        %651 = vmatmul.mubr.f32.gmra.mrb[0].mxu0 %v367
        %v652 = vpop.f32.mrb[0].mxu0
        %v653 = vadd.f32 %v460, %v652
        %v654 = vpop.f32.mrb[0].mxu0
        %655 = vmatprep.mubr.f32.mxu0 %v514
        %656 = vmatmul.mubr.f32.gmra.mrb[0].mxu0 %v369
        %v657 = vpop.f32.mrb[0].mxu0
        %v658 = vadd.f32 %v465, %v657
        %v659 = vpop.f32.mrb[0].mxu0
        %660 = vdwg.mxu0
        %v661 = vsub.f32 0.0, %v583
        %v662 = vsub.f32 0.0, %v588
        %v663 = vsub.f32 0.0, %v593
        %v664 = vsub.f32 0.0, %v598
        %v665 = vsub.f32 0.0, %v603
        %v666 = vsub.f32 0.0, %v608
        %v667 = vsub.f32 0.0, %v613
        %v668 = vsub.f32 0.0, %v618
        %v669 = vsub.f32 0.0, %v623
        %v670 = vsub.f32 0.0, %v628
        %v671 = vsub.f32 0.0, %v633
        %v672 = vsub.f32 0.0, %v638
        %v673 = vsub.f32 0.0, %v643
        %v674 = vsub.f32 0.0, %v648
        %v675 = vsub.f32 0.0, %v653
        %v676 = vsub.f32 0.0, %v658
        %v677 = vmul.f32 %v661, 1.442695
        %v678 = vpow.pop %v677
        %v679 = vmul.f32 %v662, 1.442695
        %v680 = vpow.pop %v679
        %v681 = vmul.f32 %v663, 1.442695
        %v682 = vpow.pop %v681
        %v683 = vmul.f32 %v664, 1.442695
        %v684 = vpow.pop %v683
        %v685 = vmul.f32 %v665, 1.442695
        %v686 = vpow.pop %v685
        %v687 = vmul.f32 %v666, 1.442695
        %v688 = vpow.pop %v687
        %v689 = vmul.f32 %v667, 1.442695
        %v690 = vpow.pop %v689
        %v691 = vmul.f32 %v668, 1.442695
        %v692 = vpow.pop %v691
        %v693 = vmul.f32 %v669, 1.442695
        %v694 = vpow.pop %v693
        %v695 = vmul.f32 %v670, 1.442695
        %v696 = vpow.pop %v695
        %v697 = vmul.f32 %v671, 1.442695
        %v698 = vpow.pop %v697
        %v699 = vmul.f32 %v672, 1.442695
        %v700 = vpow.pop %v699
        %v701 = vmul.f32 %v673, 1.442695
        %v702 = vpow.pop %v701
        %v703 = vmul.f32 %v674, 1.442695
        %v704 = vpow.pop %v703
        %v705 = vmul.f32 %v675, 1.442695
        %v706 = vpow.pop %v705
        %v707 = vmul.f32 %v676, 1.442695
        %v708 = vpow.pop %v707
        %v709 = vadd.f32 %v678, 1.0
        %v710 = vadd.f32 %v680, 1.0
        %v711 = vadd.f32 %v682, 1.0
        %v712 = vadd.f32 %v684, 1.0
        %v713 = vadd.f32 %v686, 1.0
        %v714 = vadd.f32 %v688, 1.0
        %v715 = vadd.f32 %v690, 1.0
        %v716 = vadd.f32 %v692, 1.0
        %v717 = vadd.f32 %v694, 1.0
        %v718 = vadd.f32 %v696, 1.0
        %v719 = vadd.f32 %v698, 1.0
        %v720 = vadd.f32 %v700, 1.0
        %v721 = vadd.f32 %v702, 1.0
        %v722 = vadd.f32 %v704, 1.0
        %v723 = vadd.f32 %v706, 1.0
        %v724 = vadd.f32 %v708, 1.0
        %v725 = vrcp.pop %v709
        %v726 = vmul.f32 1.0, %v725
        %v727 = vrcp.pop %v710
        %v728 = vmul.f32 1.0, %v727
        %v729 = vrcp.pop %v711
        %v730 = vmul.f32 1.0, %v729
        %v731 = vrcp.pop %v712
        %v732 = vmul.f32 1.0, %v731
        %v733 = vrcp.pop %v713
        %v734 = vmul.f32 1.0, %v733
        %v735 = vrcp.pop %v714
        %v736 = vmul.f32 1.0, %v735
        %v737 = vrcp.pop %v715
        %v738 = vmul.f32 1.0, %v737
        %v739 = vrcp.pop %v716
        %v740 = vmul.f32 1.0, %v739
        %v741 = vrcp.pop %v717
        %v742 = vmul.f32 1.0, %v741
        %v743 = vrcp.pop %v718
        %v744 = vmul.f32 1.0, %v743
        %v745 = vrcp.pop %v719
        %v746 = vmul.f32 1.0, %v745
        %v747 = vrcp.pop %v720
        %v748 = vmul.f32 1.0, %v747
        %v749 = vrcp.pop %v721
        %v750 = vmul.f32 1.0, %v749
        %v751 = vrcp.pop %v722
        %v752 = vmul.f32 1.0, %v751
        %v753 = vrcp.pop %v723
        %v754 = vmul.f32 1.0, %v753
        %v755 = vrcp.pop %v724
        %v756 = vmul.f32 1.0, %v755
        %v757 = vmul.f32 %v583, %v726
        %v758 = vmul.f32 %v588, %v728
        %v759 = vmul.f32 %v593, %v730
        %v760 = vmul.f32 %v598, %v732
        %v761 = vmul.f32 %v603, %v734
        %v762 = vmul.f32 %v608, %v736
        %v763 = vmul.f32 %v613, %v738
        %v764 = vmul.f32 %v618, %v740
        %v765 = vmul.f32 %v623, %v742
        %v766 = vmul.f32 %v628, %v744
        %v767 = vmul.f32 %v633, %v746
        %v768 = vmul.f32 %v638, %v748
        %v769 = vmul.f32 %v643, %v750
        %v770 = vmul.f32 %v648, %v752
        %v771 = vmul.f32 %v653, %v754
        %v772 = vmul.f32 %v658, %v756
        %v773 = vld [vmem:[%s3] sm:$0xff]
        %v774 = vld [vmem:[%s3 + $0x8] sm:$0xff]
        %v775 = vld [vmem:[%s3 + $0x10] sm:$0xff]
        %v776 = vld [vmem:[%s3 + $0x18] sm:$0xff]
        %v777 = vld [vmem:[%s3 + $0x20] sm:$0xff]
        %v778 = vld [vmem:[%s3 + $0x28] sm:$0xff]
        %v779 = vld [vmem:[%s3 + $0x30] sm:$0xff]
        %v780 = vld [vmem:[%s3 + $0x38] sm:$0xff]
        %v781 = vld [vmem:[%s4] sm:$0xff]
        %v782 = vld [vmem:[%s4 + $0x8] sm:$0xff]
        %v783 = vld [vmem:[%s4 + $0x10] sm:$0xff]
        %v784 = vld [vmem:[%s4 + $0x18] sm:$0xff]
        %v785 = vld [vmem:[%s4 + $0x20] sm:$0xff]
        %v786 = vld [vmem:[%s4 + $0x28] sm:$0xff]
        %v787 = vld [vmem:[%s4 + $0x30] sm:$0xff]
        %v788 = vld [vmem:[%s4 + $0x38] sm:$0xff]
        %790 = vset.pattern.permute.xlu0 0
        %791 = vperm.xlu0 %790, %v781
        %v792 = vpop.permute.xlu0 %791
        %795 = vset.pattern.permute.xlu0 0
        %796 = vperm.xlu0 %795, %v782
        %v797 = vpop.permute.xlu0 %796
        %800 = vset.pattern.permute.xlu0 0
        %801 = vperm.xlu0 %800, %v783
        %v802 = vpop.permute.xlu0 %801
        %805 = vset.pattern.permute.xlu0 0
        %806 = vperm.xlu0 %805, %v784
        %v807 = vpop.permute.xlu0 %806
        %810 = vset.pattern.permute.xlu0 0
        %811 = vperm.xlu0 %810, %v785
        %v812 = vpop.permute.xlu0 %811
        %815 = vset.pattern.permute.xlu0 0
        %816 = vperm.xlu0 %815, %v786
        %v817 = vpop.permute.xlu0 %816
        %820 = vset.pattern.permute.xlu0 0
        %821 = vperm.xlu0 %820, %v787
        %v822 = vpop.permute.xlu0 %821
        %825 = vset.pattern.permute.xlu0 0
        %826 = vperm.xlu0 %825, %v788
        %v827 = vpop.permute.xlu0 %826
        %829 = vmatprep.subr.mxu0 0.0
        %830 = vmatpush1.msra.mxu0 %v757
        %831 = vmatprep.subr.mxu0 0.0
        %832 = vmatpush1.msra.mxu0 %v758
        %833 = vmatprep.subr.mxu0 0.0
        %834 = vmatpush1.msra.mxu0 %v759
        %835 = vmatprep.subr.mxu0 0.0
        %836 = vmatpush1.msra.mxu0 %v760
        %837 = vmatprep.subr.mxu0 0.0
        %838 = vmatpush1.msra.mxu0 %v761
        %839 = vmatprep.subr.mxu0 0.0
        %840 = vmatpush1.msra.mxu0 %v762
        %841 = vmatprep.subr.mxu0 0.0
        %842 = vmatpush1.msra.mxu0 %v763
        %843 = vmatprep.subr.mxu0 0.0
        %844 = vmatpush1.msra.mxu0 %v764
        %845 = vmatprep.subr.mxu0 0.0
        %846 = vmatpush1.msra.mxu0 %v765
        %847 = vmatprep.subr.mxu0 0.0
        %848 = vmatpush1.msra.mxu0 %v766
        %849 = vmatprep.subr.mxu0 0.0
        %850 = vmatpush1.msra.mxu0 %v767
        %851 = vmatprep.subr.mxu0 0.0
        %852 = vmatpush1.msra.mxu0 %v768
        %853 = vmatprep.subr.mxu0 0.0
        %854 = vmatpush1.msra.mxu0 %v769
        %855 = vmatprep.subr.mxu0 0.0
        %856 = vmatpush1.msra.mxu0 %v770
        %857 = vmatprep.subr.mxu0 0.0
        %858 = vmatpush1.msra.mxu0 %v771
        %859 = vmatprep.subr.mxu0 0.0
        %860 = vmatpush1.msra.mxu0 %v772
        %861 = vmatprep.subr.mxu0 0.0
        %862 = vmatpush1.msra.mxu0 0.0
        %863 = vmatprep.subr.mxu0 0.0
        %864 = vmatpush1.msra.mxu0 0.0
        %865 = vmatprep.subr.mxu0 0.0
        %866 = vmatpush1.msra.mxu0 0.0
        %867 = vmatprep.subr.mxu0 0.0
        %868 = vmatpush1.msra.mxu0 0.0
        %869 = vmatprep.subr.mxu0 0.0
        %870 = vmatpush1.msra.mxu0 0.0
        %871 = vmatprep.subr.mxu0 0.0
        %872 = vmatpush1.msra.mxu0 0.0
        %873 = vmatprep.subr.mxu0 0.0
        %874 = vmatpush1.msra.mxu0 0.0
        %875 = vmatprep.subr.mxu0 0.0
        %876 = vmatpush1.msra.mxu0 0.0
        %877 = vmatprep.subr.mxu0 0.0
        %878 = vmatpush1.msra.mxu0 0.0
        %879 = vmatprep.subr.mxu0 0.0
        %880 = vmatpush1.msra.mxu0 0.0
        %881 = vmatprep.subr.mxu0 0.0
        %882 = vmatpush1.msra.mxu0 0.0
        %883 = vmatprep.subr.mxu0 0.0
        %884 = vmatpush1.msra.mxu0 0.0
        %885 = vmatprep.subr.mxu0 0.0
        %886 = vmatpush1.msra.mxu0 0.0
        %887 = vmatprep.subr.mxu0 0.0
        %888 = vmatpush1.msra.mxu0 0.0
        %889 = vmatprep.subr.mxu0 0.0
        %890 = vmatpush1.msra.mxu0 0.0
        %891 = vmatprep.subr.mxu0 0.0
        %892 = vmatpush1.msra.mxu0 0.0
        %893 = vmatprep.mubr.f32.mxu0 0.0
        %894 = vmatmul.mubr.f32.gmra.mrb[0].mxu0 %v773
        %v895 = vpop.f32.mrb[0].mxu0
        %v896 = vadd.f32 %v792, %v895
        %v897 = vpop.f32.mrb[0].mxu0
        %898 = vmatprep.mubr.f32.mxu0 0.0
        %899 = vmatmul.mubr.f32.gmra.mrb[0].mxu0 %v774
        %v900 = vpop.f32.mrb[0].mxu0
        %v901 = vadd.f32 %v797, %v900
        %v902 = vpop.f32.mrb[0].mxu0
        %903 = vmatprep.mubr.f32.mxu0 0.0
        %904 = vmatmul.mubr.f32.gmra.mrb[0].mxu0 %v775
        %v905 = vpop.f32.mrb[0].mxu0
        %v906 = vadd.f32 %v802, %v905
        %v907 = vpop.f32.mrb[0].mxu0
        %908 = vmatprep.mubr.f32.mxu0 0.0
        %909 = vmatmul.mubr.f32.gmra.mrb[0].mxu0 %v776
        %v910 = vpop.f32.mrb[0].mxu0
        %v911 = vadd.f32 %v807, %v910
        %v912 = vpop.f32.mrb[0].mxu0
        %913 = vmatprep.mubr.f32.mxu0 0.0
        %914 = vmatmul.mubr.f32.gmra.mrb[0].mxu0 %v777
        %v915 = vpop.f32.mrb[0].mxu0
        %v916 = vadd.f32 %v812, %v915
        %v917 = vpop.f32.mrb[0].mxu0
        %918 = vmatprep.mubr.f32.mxu0 0.0
        %919 = vmatmul.mubr.f32.gmra.mrb[0].mxu0 %v778
        %v920 = vpop.f32.mrb[0].mxu0
        %v921 = vadd.f32 %v817, %v920
        %v922 = vpop.f32.mrb[0].mxu0
        %923 = vmatprep.mubr.f32.mxu0 0.0
        %924 = vmatmul.mubr.f32.gmra.mrb[0].mxu0 %v779
        %v925 = vpop.f32.mrb[0].mxu0
        %v926 = vadd.f32 %v822, %v925
        %v927 = vpop.f32.mrb[0].mxu0
        %928 = vmatprep.mubr.f32.mxu0 0.0
        %929 = vmatmul.mubr.f32.gmra.mrb[0].mxu0 %v780
        %v930 = vpop.f32.mrb[0].mxu0
        %v931 = vadd.f32 %v827, %v930
        %v932 = vpop.f32.mrb[0].mxu0
        %933 = vdwg.mxu0
        %v934 = vadd.f32 %v896, %v223
        %v935 = vadd.f32 %v901, %v224
        %v936 = vadd.f32 %v906, %v225
        %v937 = vadd.f32 %v911, %v226
        %v938 = vadd.f32 %v916, %v227
        %v939 = vadd.f32 %v921, %v228
        %v940 = vadd.f32 %v926, %v229
        %v941 = vadd.f32 %v931, %v230
        %942 = vst [vmem:[%s217] sm:$0xff] %v934
        %943 = vst [vmem:[%s217 + $0x8] sm:$0xff] %v935
        %944 = vst [vmem:[%s217 + $0x10] sm:$0xff] %v936
        %945 = vst [vmem:[%s217 + $0x18] sm:$0xff] %v937
        %946 = vst [vmem:[%s217 + $0x20] sm:$0xff] %v938
        %947 = vst [vmem:[%s217 + $0x28] sm:$0xff] %v939
        %948 = vst [vmem:[%s217 + $0x30] sm:$0xff] %v940
        %949 = vst [vmem:[%s217 + $0x38] sm:$0xff] %v941
        %s950 = sand.u32 %s137, 1
        %s951 = scalar_lea.sflag [#allocation3], %s950
        %s952 = sand.u32 %s137, 1
        %s953 = smul.addr %s952, 64
        %s954 = scalar_lea.vmem [#allocation2], %s953
        // Predicated region
        $region41: #{tpu_custom_call.1} parent=39 // pred_check
          %p955 = pneg %p147
        $region42: #{tpu_custom_call.1} parent=39 // pred_check_branch
          %957 = sbr.rel (%p955) target = $region44
        $region43: #{tpu_custom_call.1} parent=39 // pred_region
          %s959 = ssub.s32 1024, 1024
          %960 = vsyncadd %s951, %s959
          %s961 = smul.addr %s19, 8
          %s962 = smul.addr %s961, 128
          %s963 = scalar_lea.hbm %s5, %s962
          %s964 = sshll.u32 %s954, 4
          %s965 = int_to_ptr.vmem [resolvable:$true] %s964
          %970 = dma.vmem_to_hbm [thread:$0]  %s965, 1024, %s963, %s951, 128, 128, 8
        $region44: #{tpu_custom_call.1} parent=39 // pred_fallthru
          _
      $region40: #{tpu_custom_call.1} parent=5 // pred_fallthru
        _
      %p971 = scmp.le.s32.totalorder 2, %s14
      // Predicated region
      $region45: #{tpu_custom_call.1} parent=5 // pred_check
        %p972 = pneg %p971
      $region46: #{tpu_custom_call.1} parent=5 // pred_check_branch
        %974 = sbr.rel (%p972) target = $region48
      $region47: #{tpu_custom_call.1} parent=5 // pred_region
        %s975 = ssub.s32 %s14, 2
        // Predicated region
        $region49: #{tpu_custom_call.1} parent=47 // pred_check
          %p976 = pneg %p153
        $region50: #{tpu_custom_call.1} parent=47 // pred_check_branch
          %978 = sbr.rel (%p976) target = $region52
        $region51: #{tpu_custom_call.1} parent=47 // pred_region
          %s979 = sand.u32 %s138, 1
          %s980 = scalar_lea.sflag [#allocation3], %s979
          %s981 = sand.u32 %s138, 1
          %s982 = smul.addr %s981, 64
          %s983 = scalar_lea.vmem [#allocation2], %s982
          %984 = dma.done %s980, 1024
        $region52: #{tpu_custom_call.1} parent=47 // pred_fallthru
          _
      $region48: #{tpu_custom_call.1} parent=5 // pred_fallthru
        _
    $region6: #{tpu_custom_call.1} parent=1 // loop_footer
      %s18 = sadd.s32 1, %s14
    $region7: #{tpu_custom_call.1} parent=1 // loop_footer_branch
      %13 = sbr.rel target = $region3
    $region8: #{tpu_custom_call.1} parent=1 // loop_exit
      _
    %985 = vsyncpa [#allocation3], 1
    %s986 = scalar_lea.sflag [#allocation3], 1
    %987 = vsyncpa %s986, 1

</llo_original>
